<compile_context>
chip_gen: v7x
topology: tpu7x:2x2x1
jax: 0.10.0
libtpu: 0.0.40
codegen_flags: <defaults>
</compile_context>

<pallas_src>
import functools
import math

import jax
import jax.numpy as jnp
from jax.experimental import pallas as pl
from jax.experimental.pallas import tpu as pltpu

_MIB = 1024 * 1024


def _vmem_capacity_bytes():
    try:
        cap = getattr(pltpu.get_tpu_info(), "vmem_capacity_bytes", None)
        if cap:
            return int(cap)
    except Exception:
        pass
    return 64 * _MIB  # conservative fallback (v7x per-TC VMEM)


def _plan_tiles(B, C, HW, itemsize, budget):
    """Pick (TB, C_chunk, TN) so the double-buffered native-dtype input block
    plus ~5 f32-sized in-kernel temporaries fit `budget` bytes."""
    lane_cost = 2 * itemsize + 20          # bytes per (channel-row, lane)
    hw128 = pl.cdiv(HW, 128) * 128

    # Channel axis: keep it fully resident unless even a 512-lane tile would
    # not fit; otherwise stream it in multiple-of-8 chunks sized for TN>=1024.
    if C * 512 * lane_cost <= budget:
        c_chunk = C
    else:
        c_chunk = (budget // (1024 * lane_cost)) // 8 * 8
        c_chunk = int(max(8, min(c_chunk, C)))

    tn = budget // (c_chunk * lane_cost)
    tn = int(max(128, (tn // 128) * 128))
    tn = min(tn, hw128)

    # Batch blocking: grow TB (a divisor of B) until the input block reaches
    # ~2 MiB, so tiny-HW shapes are not per-grid-step-overhead bound.
    tb = 1
    if c_chunk == C:
        target = 2 * _MIB
        while (tb < B and B % (tb * 2) == 0
               and (tb * 2) * C * tn * lane_cost <= budget
               and tb * C * tn * itemsize < target):
            tb *= 2
    return tb, c_chunk, tn, lane_cost


def _chunk_stats(x, row_limit=None):
    """Softmax statistics of a (TB, c, TN) f32 chunk, reduced over axis 1.

    Returns (m, s, t), each (TB, 1, TN):
      m = max_c x,  s = sum_c exp(x-m),  t = sum_c (x-m)*exp(x-m).
    If `row_limit` is given, channel rows >= row_limit are excluded
    (ragged channel tail of the streaming path)."""
    if row_limit is None:
        m = jnp.max(x, axis=1, keepdims=True)
        z = x - m
        e = jnp.exp(z)
        return (m, jnp.sum(e, axis=1, keepdims=True),
                jnp.sum(e * z, axis=1, keepdims=True))
    rows = jax.lax.broadcasted_iota(jnp.int32, x.shape, 1)
    valid = rows < row_limit
    m = jnp.max(jnp.where(valid, x, -jnp.inf), axis=1, keepdims=True)
    z = x - m
    e_raw = jnp.exp(z)
    e = jnp.where(valid, e_raw, 0.0)
    ez = jnp.where(valid, e_raw * z, 0.0)
    return (m, jnp.sum(e, axis=1, keepdims=True),
            jnp.sum(ez, axis=1, keepdims=True))


def _merge_stats(m0, s0, t0, m1, s1, t1):
    """Merge softmax stats of two disjoint channel chunks (online softmax)."""
    m = jnp.maximum(m0, m1)
    a0 = jnp.exp(m0 - m)
    a1 = jnp.exp(m1 - m)
    s = a0 * s0 + a1 * s1
    t = a0 * (t0 + (m0 - m) * s0) + a1 * (t1 + (m1 - m) * s1)
    return m, s, t


def _ent_kernel(x_ref, out_ref, m_sc, s_sc, t_sc, acc_sc, *,
                mode, nk, c_rem, tn, hw, inv_log_c):
    """Grid: (batch_blocks, p_split, position_blocks, channel_blocks).

    x_ref   : (TB, C_chunk, TN) logits block (native dtype)
    out_ref : mode='none'  -> (TB, 1, TN)  per-position loss block
              mode='reduce'-> (1, 1, 1, 1) per-(batch-block, p) partial sum
    m/s/t_sc: (TB, 1, TN) online softmax state (only used when nk > 1)
    acc_sc  : (TB, 1, TN) per-lane loss accumulator (only used for 'reduce')
    """
    p = pl.program_id(1)
    j = pl.program_id(2)
    k = pl.program_id(3)

    x = x_ref[...].astype(jnp.float32)                 # (TB, C_chunk, TN)

    # Per-chunk softmax stats. The channel mask is only emitted when C is
    # streamed AND ragged (static condition).
    if nk > 1 and c_rem:
        limit = jnp.where(k == nk - 1, c_rem, x.shape[1])
        mc, sc, tc = _chunk_stats(x, row_limit=limit)
    else:
        mc, sc, tc = _chunk_stats(x)

    if nk > 1:
        # Stream channels: merge chunk stats into the running state.
        @pl.when(k == 0)
        def _():
            m_sc[...], s_sc[...], t_sc[...] = mc, sc, tc

        @pl.when(k > 0)
        def _():
            m, s, t = _merge_stats(m_sc[...], s_sc[...], t_sc[...], mc, sc, tc)
            m_sc[...], s_sc[...], t_sc[...] = m, s, t

    def finalize():
        if nk > 1:
            s, t = s_sc[...], t_sc[...]
        else:
            s, t = sc, tc
        # entropy = log(s) - t/s == -sum_c p*log p ; normalized by log(C)
        # TODO(synk): if v7x bundle dumps show the VALU slot saturated for
        # bf16 inputs, offload the channel sums (s, t) to the MXU via a
        # ones-row matmul.
        ent = (jnp.log(s) - t * pl.reciprocal(s, approx=False)) * inv_log_c

        if mode == "none":
            # TODO(synk): pack result rows sublane-dense before writeback if
            # the masked 1-sublane store becomes the binding slot on v7x.
            out_ref[...] = ent.astype(out_ref.dtype)
            return

        # mode == 'reduce': per-lane accumulate; one cross-lane reduce per
        # (batch-block, p) on the very last position block.
        @pl.when(j == 0)
        def _():
            acc_sc[...] = jnp.zeros_like(acc_sc)

        rem = hw % tn
        if rem:
            # Only the globally-last position block is ragged; keep the mask
            # out of the hot loop.
            last_pos = jnp.logical_and(p == pl.num_programs(1) - 1,
                                       j == pl.num_programs(2) - 1)

            @pl.when(last_pos)
            def _():
                col = jax.lax.broadcasted_iota(jnp.int32, ent.shape, 2)
                acc_sc[...] += jnp.where(col < rem, ent, 0.0)

            @pl.when(jnp.logical_not(last_pos))
            def _():
                acc_sc[...] += ent
        else:
            acc_sc[...] += ent

        @pl.when(j == pl.num_programs(2) - 1)
        def _():
            out_ref[0] = jnp.sum(acc_sc[...], keepdims=True)

    if nk > 1:
        pl.when(k == nk - 1)(finalize)
    else:
        finalize()


def normalized_entropy_loss(logits, reduction="mean", *,
                            _force_tn=None, _force_c_chunk=None):
    """JAX/Pallas equivalent of NormalizedEntropyLoss.forward."""
    assert reduction in ("none", "mean", "sum"), "invalid reduction"
    assert logits.ndim in (3, 4)

    B, C = int(logits.shape[0]), int(logits.shape[1])
    spatial = tuple(int(d) for d in logits.shape[2:])
    HW = 1
    for d in spatial:
        HW *= d

    # Free reshape (contiguous trailing-dim collapse): no transpose, no cast.
    x = logits.reshape(B, C, HW)
    itemsize = jnp.dtype(logits.dtype).itemsize

    cap = _vmem_capacity_bytes()
    budget = int(min(48 * _MIB, cap // 2))
    tb, c_chunk, tn, lane_cost = _plan_tiles(B, C, HW, itemsize, budget)
    if _force_tn is not None:                       # test hook
        tn = int(_force_tn)
    if _force_c_chunk is not None:                  # test hook
        c_chunk = int(min(_force_c_chunk, C))
        if c_chunk < C:
            tb = 1
    if B % tb:
        tb = 1

    bb = B // tb
    n_pos = pl.cdiv(HW, tn)
    nk = pl.cdiv(C, c_chunk)
    c_rem = C % c_chunk
    inv_log_c = float("inf") if C == 1 else 1.0 / math.log(C)

    # v7x megacore: if the batch grid collapses, split the position axis into
    # an extra parallel axis for the sum/mean path.
    if reduction == "none":
        p_split = 1
    else:
        p_split = 2 if (bb == 1 and n_pos >= 2 and n_pos % 2 == 0) else 1
    jp = n_pos // p_split
    grid = (bb, p_split, jp, nk)

    need = tb * c_chunk * tn * lane_cost + 8 * tb * tn * 4 + 2 * _MIB
    vmem_limit = int(min(cap - 8 * _MIB, max(32 * _MIB, need + 16 * _MIB)))

    # TODO(synk): sweep pipeline_mode=pl.Buffered(3) on the input spec if
    # xprof shows exposed DMA at block boundaries on v7x.
    in_specs = [pl.BlockSpec((tb, c_chunk, tn),
                             lambda b, p, j, k: (b, k, p * jp + j))]
    scratch = [pltpu.VMEM((tb, 1, tn), jnp.float32) for _ in range(4)]
    kern = functools.partial(_ent_kernel, nk=nk, c_rem=c_rem, tn=tn, hw=HW,
                             inv_log_c=inv_log_c)

    if reduction == "none":
        loss = pl.pallas_call(
            functools.partial(kern, mode="none"),
            out_shape=jax.ShapeDtypeStruct((B, 1, HW), logits.dtype),
            grid_spec=pltpu.PrefetchScalarGridSpec(
                num_scalar_prefetch=0,
                grid=grid,
                in_specs=in_specs,
                out_specs=pl.BlockSpec((tb, 1, tn),
                                       lambda b, p, j, k: (b, 0, p * jp + j)),
                scratch_shapes=scratch),
            compiler_params=pltpu.CompilerParams(
                dimension_semantics=("parallel", "parallel", "parallel",
                                     "arbitrary"),
                vmem_limit_bytes=vmem_limit),
        )(x)
        return loss.reshape((B,) + spatial)

    # 'sum' / 'mean': per-(batch-block, p) partial sums only; no per-position
    # HBM writeback at all.
    partials = pl.pallas_call(
        functools.partial(kern, mode="reduce"),
        out_shape=jax.ShapeDtypeStruct((bb, p_split, 1, 1), jnp.float32),
        grid_spec=pltpu.PrefetchScalarGridSpec(
            num_scalar_prefetch=0,
            grid=grid,
            in_specs=in_specs,
            out_specs=pl.BlockSpec((1, 1, 1, 1),
                                   lambda b, p, j, k: (b, p, 0, 0)),
            scratch_shapes=scratch),
        compiler_params=pltpu.CompilerParams(
            dimension_semantics=("parallel", "parallel", "arbitrary",
                                 "arbitrary"),
            vmem_limit_bytes=vmem_limit),
    )(x)

    total = jnp.sum(partials)
    if reduction == "sum":
        return total.astype(logits.dtype)
    return (total / jnp.float32(B * HW)).astype(logits.dtype)


def _reference(logits, reduction):
    dim = logits.shape[1]
    x = logits.astype(jnp.float32)
    p = jax.nn.softmax(x, axis=1)
    logp = jax.nn.log_softmax(x, axis=1)
    ent = -jnp.sum(p * logp, axis=1)
    loss = ent / math.log(dim)
    if reduction == "none":
        return loss
    if reduction == "sum":
        return jnp.sum(loss)
    return jnp.mean(loss)


if __name__ == "__main__":
    ok = True
    k1, k2, k3, k4, k5 = jax.random.split(jax.random.PRNGKey(0), 5)

    cases = [
        # default plan, 4D NCHW logits
        (jax.random.normal(k1, (2, 4, 16, 16), dtype=jnp.float32), {}),
        # 3D logits, ragged (non multiple-of-128) position count
        (jax.random.normal(k2, (2, 8, 200), dtype=jnp.float32), {}),
        # tiny spatial extent (block wider than HW)
        (jax.random.normal(k3, (2, 4, 8, 8), dtype=jnp.float32), {}),
        # B=1: exercises the megacore position split in the sum/mean path
        (jax.random.normal(k4, (1, 8, 512), dtype=jnp.float32),
         {"_force_tn": 128}),
        # large-C streaming path (ragged channel tail + ragged position tail)
        (4.0 * jax.random.normal(k5, (2, 37, 300), dtype=jnp.float32),
         {"_force_tn": 128, "_force_c_chunk": 16}),
    ]

    for logits, kw in cases:
        for red in ("none", "mean", "sum"):
            out = jax.block_until_ready(
                normalized_entropy_loss(logits, reduction=red, **kw))
            ref = _reference(logits, red)
            if not jnp.allclose(out, ref, atol=1e-5, rtol=1e-5):
                ok = False
                print(f"MISMATCH shape={tuple(logits.shape)} "
                      f"reduction={red} kw={kw}")

    if ok:
        print("KERNEL_OK")
</pallas_src>

<mosaic_0001>
module attributes {stable_mosaic.version = 11 : i64} {
  func.func @_ent_kernel(%arg0: i32, %arg1: i32, %arg2: i32, %arg3: i32, %arg4: memref<2x4x256xf32, #tpu.memory_space<vmem>>, %arg5: memref<2x1x256xf32, #tpu.memory_space<vmem>>, %arg6: memref<2x1x256xf32, #tpu.memory_space<vmem>>, %arg7: memref<2x1x256xf32, #tpu.memory_space<vmem>>, %arg8: memref<2x1x256xf32, #tpu.memory_space<vmem>>, %arg9: memref<2x1x256xf32, #tpu.memory_space<vmem>>) attributes {dimension_semantics = [#tpu.dimension_semantics<parallel>, #tpu.dimension_semantics<parallel>, #tpu.dimension_semantics<parallel>, #tpu.dimension_semantics<arbitrary>], iteration_bounds = array<i64: 1, 1, 1, 1>, scalar_prefetch = 0 : i64, scratch_operands = 4 : i64, tpu.core_type = #tpu.core_type<tc>, window_params = [{transform_indices = @transform_0, window_bounds = array<i64: 2, 4, 256>}, {transform_indices = @transform_1, window_bounds = array<i64: 2, 1, 256>}]} {
    %c0 = arith.constant 0 : index
    %c0_0 = arith.constant 0 : index
    %c0_1 = arith.constant 0 : index
    %0 = vector.load %arg4[%c0, %c0_0, %c0_1] : memref<2x4x256xf32, #tpu.memory_space<vmem>>, vector<2x4x256xf32>
    %cst = arith.constant dense<0xFF800000> : vector<2x256xf32>
    %1 = vector.multi_reduction <maximumf>, %0, %cst [1] : vector<2x4x256xf32> to vector<2x256xf32>
    %2 = vector.shape_cast %1 : vector<2x256xf32> to vector<2x1x256xf32>
    %3 = vector.broadcast %2 : vector<2x1x256xf32> to vector<2x4x256xf32>
    %4 = arith.subf %0, %3 : vector<2x4x256xf32>
    %5 = math.exp %4 : vector<2x4x256xf32>
    %cst_2 = arith.constant dense<0.000000e+00> : vector<2x256xf32>
    %6 = vector.multi_reduction <add>, %5, %cst_2 [1] : vector<2x4x256xf32> to vector<2x256xf32>
    %7 = vector.shape_cast %6 : vector<2x256xf32> to vector<2x1x256xf32>
    %8 = arith.mulf %5, %4 : vector<2x4x256xf32>
    %cst_3 = arith.constant dense<0.000000e+00> : vector<2x256xf32>
    %9 = vector.multi_reduction <add>, %8, %cst_3 [1] : vector<2x4x256xf32> to vector<2x256xf32>
    %10 = vector.shape_cast %9 : vector<2x256xf32> to vector<2x1x256xf32>
    %11 = math.log %7 : vector<2x1x256xf32>
    %12 = tpu.reciprocal %7 : vector<2x1x256xf32> -> vector<2x1x256xf32>
    %13 = arith.mulf %10, %12 : vector<2x1x256xf32>
    %14 = arith.subf %11, %13 : vector<2x1x256xf32>
    %cst_4 = arith.constant 0.72134751 : f32
    %15 = vector.broadcast %cst_4 : f32 to vector<2x1x256xf32>
    %16 = arith.mulf %14, %15 : vector<2x1x256xf32>
    %c0_5 = arith.constant 0 : index
    %c0_6 = arith.constant 0 : index
    %c0_7 = arith.constant 0 : index
    %17 = vector.load %arg5[%c0_5, %c0_6, %c0_7] : memref<2x1x256xf32, #tpu.memory_space<vmem>>, vector<2x1x256xf32>
    tpu.vector_store %arg5[%c0_5, %c0_6, %c0_7], %16 {strides = array<i32>} : memref<2x1x256xf32, #tpu.memory_space<vmem>>, vector<2x1x256xf32>,
    return
  }
  func.func @transform_0(%arg0: i32, %arg1: i32, %arg2: i32, %arg3: i32) -> (i32, i32, i32) {
    %c1_i32 = arith.constant 1 : i32
    %0 = arith.muli %arg1, %c1_i32 : i32
    %1 = arith.addi %0, %arg2 : i32
    %c0_i32 = arith.constant 0 : i32
    return %arg0, %arg3, %1 : i32, i32, i32
  }
  func.func @transform_1(%arg0: i32, %arg1: i32, %arg2: i32, %arg3: i32) -> (i32, i32, i32) {
    %c1_i32 = arith.constant 1 : i32
    %0 = arith.muli %arg1, %c1_i32 : i32
    %1 = arith.addi %0, %arg2 : i32
    %c0_i32 = arith.constant 0 : i32
    %c0_i32_0 = arith.constant 0 : i32
    return %arg0, %c0_i32, %1 : i32, i32, i32
  }
}

</mosaic_0001>

<llo_original>
// kernel: tpu_custom_call.1
$region0: #{tpu_custom_call.1}
  #allocation0 [shape = 'u32[]', space=smem, size = 0x4, offset = 0x4, fixed_abs, tag = 'smem constant byte address 0x4 - core index']
  #allocation1 [shape = 'u32[144,128]{1,0:T(1,128)}', space=vmem, size = 0x12000, scoped, tag = 'internal scratch']
  #allocation2 [shape = 'f32[2,1,256]{2,1,0:T(1,128)}', space=vmem, size = 0x800, scoped, tag = 'scratch operand']
  #allocation3 [shape = 'f32[2,1,256]{2,1,0:T(1,128)}', space=vmem, size = 0x800, scoped, tag = 'scratch operand']
  #allocation4 [shape = 'f32[2,1,256]{2,1,0:T(1,128)}', space=vmem, size = 0x800, scoped, tag = 'scratch operand']
  #allocation5 [shape = 'f32[2,1,256]{2,1,0:T(1,128)}', space=vmem, size = 0x800, scoped, tag = 'scratch operand']
  %s0 = inlined_call_operand.hbm [shape: f32[2,4,256], index: 0, kind: input, shape index: {}]
  %s1 = inlined_call_operand.hbm [shape: f32[2,1,256], index: 1, kind: output, shape index: {}]
  %s2 = sld [smem:[#allocation0]]
  $region18: #{tpu_custom_call.1} parent=0
    _
  %s4 = ssub.s32 1, %s2
  %s5 = scalar_select 0, %s4, %s2
  $region1: #{tpu_custom_call.1} parent=0
    #allocation6 [shape = 'u8[8192]{0}', space=vmem, size = 0x2000, scoped, tag = 'input window, operand 0, single buffered']
    #allocation7 [shape = 's32[1]{0}', space=sflag, size = 0x4, scoped, tag = 'scoped memory for tpu_custom_call.1']
    #allocation8 [shape = 's32[1]{0}', space=sflag, size = 0x4, scoped, tag = 'scoped memory for tpu_custom_call.1']
    #allocation9 [shape = 'u8[2048]{0}', space=vmem, size = 0x800, scoped, tag = 'output window, operand 0, single buffered']
    %6 = vsyncpa [#allocation7], 0
    %7 = vsyncpa [#allocation8], 0
    // Predicated region
    $region2: #{tpu_custom_call.1} parent=1 // pred_check
      _
    $region3: #{tpu_custom_call.1} parent=1 // pred_check_branch
      %9 = sbr.rel (0) target = $region5
    $region4: #{tpu_custom_call.1} parent=1 // pred_region
      %s10 = sadd.s32 0, 0
      %s11 = smul.u32 2, %s10
      %s13 = ssub.s32 256, 256
      %14 = vsyncadd [#allocation7], %s13
      %s15 = smul.addr %s11, 64
      %s16 = scalar_lea.hbm %s0, %s15
      %s17 = sshll.u32 [#allocation6], 4
      %s18 = int_to_ptr.vmem [resolvable:$true] %s17
      %23 = dma.hbm_to_vmem [thread:$0]  %s16, 256, %s18, [#allocation7], 128, 128, 8
    $region5: #{tpu_custom_call.1} parent=1 // pred_fallthru
      _
    // Predicated region
    $region6: #{tpu_custom_call.1} parent=1 // pred_check
      _
    $region7: #{tpu_custom_call.1} parent=1 // pred_check_branch
      %25 = sbr.rel (0) target = $region9
    $region8: #{tpu_custom_call.1} parent=1 // pred_region
      %26 = dma.done [#allocation7], 256
    $region9: #{tpu_custom_call.1} parent=1 // pred_fallthru
      _
    %s27 = sadd.s32 0, 0
    %s28 = smul.u32 2, %s27
    %s29 = sadd.s32 0, 0
    %s30 = smul.u32 2, %s29
    %v31 = vld [vmem:[#allocation6] sm:$0xff]
    %v32 = vld [vmem:[#allocation6 + $0x8] sm:$0xff]
    %v35 = vcombine.high %v31, %v31
    %v36 = vcombine.high %v32, %v32
    %vm39 = vcmask 1043456
    %v40 = vsel %vm39, %v31, -inf
    %v41 = vrot.slane %v40, 4
    %v42 = vmax.f32 %v40, %v41
    %v43 = vrot.slane %v42, 2
    %v44 = vmax.f32 %v42, %v43
    %v45 = vrot.slane %v44, 1
    %v46 = vmax.f32 %v44, %v45
    %v47 = vsel %vm39, %v35, -inf
    %v48 = vrot.slane %v47, 4
    %v49 = vmax.f32 %v47, %v48
    %v50 = vrot.slane %v49, 2
    %v51 = vmax.f32 %v49, %v50
    %v52 = vrot.slane %v51, 1
    %v53 = vmax.f32 %v51, %v52
    %v54 = vsel %vm39, %v32, -inf
    %v55 = vrot.slane %v54, 4
    %v56 = vmax.f32 %v54, %v55
    %v57 = vrot.slane %v56, 2
    %v58 = vmax.f32 %v56, %v57
    %v59 = vrot.slane %v58, 1
    %v60 = vmax.f32 %v58, %v59
    %v61 = vsel %vm39, %v36, -inf
    %v62 = vrot.slane %v61, 4
    %v63 = vmax.f32 %v61, %v62
    %v64 = vrot.slane %v63, 2
    %v65 = vmax.f32 %v63, %v64
    %v66 = vrot.slane %v65, 1
    %v67 = vmax.f32 %v65, %v66
    %v72 = vcombine.low %v46, %v53
    %v73 = vcombine.low %v60, %v67
    %v76 = vsub.f32 %v31, %v72
    %v77 = vsub.f32 %v32, %v73
    %v78 = vmul.f32 %v76, 1.442695
    %v79 = vpow.pop %v78
    %v80 = vmul.f32 %v77, 1.442695
    %v81 = vpow.pop %v80
    %v84 = vcombine.high %v79, %v79
    %v85 = vcombine.high %v81, %v81
    %v88 = vsel %vm39, %v79, 0.0
    %v89 = vrot.slane %v88, 4
    %v90 = vadd.f32 %v88, %v89
    %v91 = vrot.slane %v90, 2
    %v92 = vadd.f32 %v90, %v91
    %v93 = vrot.slane %v92, 1
    %v94 = vadd.f32 %v92, %v93
    %v95 = vsel %vm39, %v84, 0.0
    %v96 = vrot.slane %v95, 4
    %v97 = vadd.f32 %v95, %v96
    %v98 = vrot.slane %v97, 2
    %v99 = vadd.f32 %v97, %v98
    %v100 = vrot.slane %v99, 1
    %v101 = vadd.f32 %v99, %v100
    %v102 = vsel %vm39, %v81, 0.0
    %v103 = vrot.slane %v102, 4
    %v104 = vadd.f32 %v102, %v103
    %v105 = vrot.slane %v104, 2
    %v106 = vadd.f32 %v104, %v105
    %v107 = vrot.slane %v106, 1
    %v108 = vadd.f32 %v106, %v107
    %v109 = vsel %vm39, %v85, 0.0
    %v110 = vrot.slane %v109, 4
    %v111 = vadd.f32 %v109, %v110
    %v112 = vrot.slane %v111, 2
    %v113 = vadd.f32 %v111, %v112
    %v114 = vrot.slane %v113, 1
    %v115 = vadd.f32 %v113, %v114
    %v116 = vmul.f32 %v79, %v76
    %v117 = vmul.f32 %v81, %v77
    %v120 = vcombine.high %v116, %v116
    %v121 = vcombine.high %v117, %v117
    %v124 = vsel %vm39, %v116, 0.0
    %v125 = vrot.slane %v124, 4
    %v126 = vadd.f32 %v124, %v125
    %v127 = vrot.slane %v126, 2
    %v128 = vadd.f32 %v126, %v127
    %v129 = vrot.slane %v128, 1
    %v130 = vadd.f32 %v128, %v129
    %v131 = vsel %vm39, %v120, 0.0
    %v132 = vrot.slane %v131, 4
    %v133 = vadd.f32 %v131, %v132
    %v134 = vrot.slane %v133, 2
    %v135 = vadd.f32 %v133, %v134
    %v136 = vrot.slane %v135, 1
    %v137 = vadd.f32 %v135, %v136
    %v138 = vsel %vm39, %v117, 0.0
    %v139 = vrot.slane %v138, 4
    %v140 = vadd.f32 %v138, %v139
    %v141 = vrot.slane %v140, 2
    %v142 = vadd.f32 %v140, %v141
    %v143 = vrot.slane %v142, 1
    %v144 = vadd.f32 %v142, %v143
    %v145 = vsel %vm39, %v121, 0.0
    %v146 = vrot.slane %v145, 4
    %v147 = vadd.f32 %v145, %v146
    %v148 = vrot.slane %v147, 2
    %v149 = vadd.f32 %v147, %v148
    %v150 = vrot.slane %v149, 1
    %v151 = vadd.f32 %v149, %v150
    %v152 = vlog2.pop %v94
    %v153 = vmul.f32 %v152, 0.6931472
    %v154 = vlog2.pop %v101
    %v155 = vmul.f32 %v154, 0.6931472
    %v156 = vlog2.pop %v108
    %v157 = vmul.f32 %v156, 0.6931472
    %v158 = vlog2.pop %v115
    %v159 = vmul.f32 %v158, 0.6931472
    %v160 = vrcp.pop %v94
    %v161 = vrcp.pop %v101
    %v162 = vrcp.pop %v108
    %v163 = vrcp.pop %v115
    %v164 = vmul.f32 %v130, %v160
    %v165 = vmul.f32 %v137, %v161
    %v166 = vmul.f32 %v144, %v162
    %v167 = vmul.f32 %v151, %v163
    %v168 = vsub.f32 %v153, %v164
    %v169 = vsub.f32 %v155, %v165
    %v170 = vsub.f32 %v157, %v166
    %v171 = vsub.f32 %v159, %v167
    %v172 = vmul.f32 %v168, 0.7213475
    %v173 = vmul.f32 %v169, 0.7213475
    %v174 = vmul.f32 %v170, 0.7213475
    %v175 = vmul.f32 %v171, 0.7213475
    %v180 = vcombine.low %v172, %v173
    %v182 = vunpack.c.l.s4 1966171168
    %v183 = vunpack.c.0.s8 %v182
    %v184 = vlaneseq
    %v185 = vshrl.u32 %v184, 7
    %v186 = vsub.s32 %v183, %v185
    %v187 = vrot.slane %v180, %v186
    %v189 = vunpack.c.l.s4 1966171168
    %v190 = vunpack.c.0.s8 %v189
    %v191 = vlaneseq
    %v192 = vshrl.u32 %v191, 7
    %v193 = vsub.s32 %v190, %v192
    %v194 = vrot.slane %v187, %v193
    %v195 = vcombine.low %v174, %v175
    %v197 = vunpack.c.l.s4 1966171168
    %v198 = vunpack.c.0.s8 %v197
    %v199 = vlaneseq
    %v200 = vshrl.u32 %v199, 7
    %v201 = vsub.s32 %v198, %v200
    %v202 = vrot.slane %v195, %v201
    %v204 = vunpack.c.l.s4 1966171168
    %v205 = vunpack.c.0.s8 %v204
    %v206 = vlaneseq
    %v207 = vshrl.u32 %v206, 7
    %v208 = vsub.s32 %v205, %v207
    %v209 = vrot.slane %v202, %v208
    %v212 = vlaneseq
    %vm213 = vcmp.ge.s32.totalorder %v212, 0
    %vm214 = vcmp.lt.s32.totalorder %v212, 256
    %vm215 = vmand %vm213, %vm214
    %216 = vst.msk [vmem:[#allocation9] sm:$0x3] %vm215, %v194
    %217 = vst.msk [vmem:[#allocation9 + $0x2] sm:$0x3] %vm215, %v209
    // Predicated region
    $region10: #{tpu_custom_call.1} parent=1 // pred_check
      _
    $region11: #{tpu_custom_call.1} parent=1 // pred_check_branch
      %219 = sbr.rel (0) target = $region13
    $region12: #{tpu_custom_call.1} parent=1 // pred_region
      %s220 = sadd.s32 0, 0
      %s221 = smul.u32 2, %s220
      %s223 = ssub.s32 64, 64
      %224 = vsyncadd [#allocation8], %s223
      %s225 = smul.addr %s221, 16
      %s226 = scalar_lea.hbm %s1, %s225
      %s227 = sshll.u32 [#allocation9], 4
      %s228 = int_to_ptr.vmem [resolvable:$true] %s227
      %233 = dma.vmem_to_hbm [thread:$0]  %s228, 64, %s226, [#allocation8], 32, 32, 2
    $region13: #{tpu_custom_call.1} parent=1 // pred_fallthru
      _
    // Predicated region
    $region14: #{tpu_custom_call.1} parent=1 // pred_check
      _
    $region15: #{tpu_custom_call.1} parent=1 // pred_check_branch
      %235 = sbr.rel (0) target = $region17
    $region16: #{tpu_custom_call.1} parent=1 // pred_region
      %236 = dma.done [#allocation8], 64
    $region17: #{tpu_custom_call.1} parent=1 // pred_fallthru
      _
    %237 = vsyncpa [#allocation7], 1
    %238 = vsyncpa [#allocation8], 1

</llo_original>
